<compile_context>
chip_gen: v7x
topology: tpu7x:2x2x1
jax: 0.10.0
libtpu: 0.0.40
codegen_flags: <defaults>
</compile_context>

<pallas_src>
import math

import jax
import jax.numpy as jnp
from jax import lax
from jax.experimental import pallas as pl
from jax.experimental.pallas import tpu as pltpu


def _vmem_limit_bytes(frac=0.75):
    """Scoped-VMEM budget: ~75% of physical VMEM (64 MiB on v7x, 128 MiB on
    v5e/v6e), leaving headroom for the compiler."""
    try:
        cap = pltpu.get_tpu_info().vmem_capacity_bytes
    except Exception:
        cap = 128 * 1024 * 1024
    return int(cap * frac)


def _pick_tile(n, cap):
    """Largest tile <= cap that divides n (standard sizes), else the full axis."""
    if n <= cap:
        return n
    for t in (cap, 512, 256, 128, 64, 32, 16, 8):
        if t <= cap and n % t == 0:
            return t
    return n  # full-extent block is always legal


# ---------------------------------------------------------------------------
# Kernel 1: head-fused K/V projection, computed exactly once over the text.
# ---------------------------------------------------------------------------
def _kv_proj_kernel(text_ref, wkv_ref, k_ref, v_ref):
    # kv = text_tile @ [Wk_0; ...; Wk_{H-1}; Wv_0; ...; Wv_{H-1}]^T
    # Transpose folded into dot_general; f32 accumulation out of the MXU, then
    # stored in the (bf16) cache dtype for the attention kernel's MXU feeds.
    he = k_ref.shape[1]                                   # H * E
    kv = lax.dot_general(text_ref[...], wkv_ref[...], (((1,), (1,)), ((), ())),
                         preferred_element_type=jnp.float32)
    k_ref[...] = kv[:, :he].astype(k_ref.dtype)
    v_ref[...] = kv[:, he:].astype(v_ref.dtype)


# ---------------------------------------------------------------------------
# Kernel 2: cross attention (online softmax over text tiles) + output linear
#           + residual.  Grid = (latent tiles [parallel], text tiles [arbitrary]).
# ---------------------------------------------------------------------------
def _cross_attn_kernel(lat_ref, wq_ref, k_ref, v_ref, wl_ref, o_ref,
                       q_scr, m_scr, l_scr, acc_scr):
    j = pl.program_id(1)
    n_kv = pl.num_programs(1)

    cdt = lat_ref.dtype                     # native MXU operand dtype
    H = m_scr.shape[0]
    E = q_scr.shape[1] // H
    L = lat_ref.shape[1]

    @pl.when(j == 0)
    def _init():
        # Head-fused Q projection (single MXU pass, N = H*E).  1/sqrt(d_k) is
        # already folded into wq on the host.
        q = lax.dot_general(lat_ref[...], wq_ref[...], (((1,), (1,)), ((), ())),
                            preferred_element_type=jnp.float32)
        q_scr[...] = q.astype(cdt)
        m_scr[...] = jnp.full(m_scr.shape, -jnp.inf, m_scr.dtype)
        l_scr[...] = jnp.zeros(l_scr.shape, l_scr.dtype)
        acc_scr[...] = jnp.zeros(acc_scr.shape, acc_scr.dtype)

    # Online softmax over the text axis, per head.  H is small and static, so
    # the Python loop unrolls at trace time (no per-head grid-step overhead).
    for h in range(H):
        q_h = q_scr[:, h * E:(h + 1) * E]                 # (TQ, E)  cdt
        k_h = k_ref[:, h * E:(h + 1) * E]                 # (TK, E)  cdt
        v_h = v_ref[:, h * L:(h + 1) * L]                 # (TK, L)  cdt

        s = lax.dot_general(q_h, k_h, (((1,), (1,)), ((), ())),
                            preferred_element_type=jnp.float32)      # (TQ, TK)
        m_prev = m_scr[h]                                 # (TQ, 1) f32
        m_new = jnp.maximum(m_prev, jnp.max(s, axis=1, keepdims=True))
        alpha = jnp.exp(m_prev - m_new)                   # (TQ, 1)
        p = jnp.exp(s - m_new)                            # (TQ, TK) f32

        l_scr[h] = alpha * l_scr[h] + jnp.sum(p, axis=1, keepdims=True)
        pv = lax.dot_general(p.astype(cdt), v_h, (((1,), (0,)), ((), ())),
                             preferred_element_type=jnp.float32)     # (TQ, L)
        acc_scr[h] = alpha * acc_scr[h] + pv
        m_scr[h] = m_new

    @pl.when(j == n_kv - 1)
    def _finalize():
        # Normalize AFTER the P@V matmul (O(TQ*L) f32 multiplies, EUP recip),
        # then one head-fused output-linear contraction over H*L + residual.
        outs = []
        for h in range(H):
            inv_l = pl.reciprocal(l_scr[h], approx=True)  # (TQ, 1) f32
            outs.append((acc_scr[h] * inv_l).astype(cdt)) # (TQ, L)
        cat = jnp.concatenate(outs, axis=1)               # (TQ, H*L)
        contrib = lax.dot_general(cat, wl_ref[...], (((1,), (1,)), ((), ())),
                                  preferred_element_type=jnp.float32)  # (TQ, L)
        o_ref[...] = (contrib + lat_ref[...].astype(jnp.float32)).astype(o_ref.dtype)


def cross_multi_headed_pallas(latent, text, wq, wk, wv, wl,
                              *, q_tile=None, kv_tile=None):
    """
    latent: (N_lat, L)       text: (N_txt, E)
    wq: (H, E, L)  wk: (H, E, E)  wv: (H, L, E)  wl: (L, H*L)   (torch [out,in])
    returns: (N_lat, L)  ==  Linear(cat_h(softmax(QK^T/sqrt(E)) V)) + latent
    """
    n_lat, L = latent.shape
    n_txt, E = text.shape
    H = wq.shape[0]
    dtype = latent.dtype

    # --- host-side weight packing: fuse heads, fold 1/sqrt(d_k) into Wq ------
    scale = 1.0 / math.sqrt(E)
    wq_all = (wq.astype(jnp.float32) * scale).astype(dtype).reshape(H * E, L)
    wkv_all = jnp.concatenate(
        [wk.astype(dtype).reshape(H * E, E),
         wv.astype(dtype).reshape(H * L, E)], axis=0)      # (H*(E+L), E)
    wl = wl.astype(dtype)                                  # (L, H*L)

    vmem = _vmem_limit_bytes()

    # --- kernel 1: K/V for all heads, computed exactly once ------------------
    proj_tile = _pick_tile(n_txt, 256)
    k_all, v_all = pl.pallas_call(
        _kv_proj_kernel,
        out_shape=(jax.ShapeDtypeStruct((n_txt, H * E), dtype),
                   jax.ShapeDtypeStruct((n_txt, H * L), dtype)),
        grid_spec=pltpu.PrefetchScalarGridSpec(
            num_scalar_prefetch=0,
            grid=(n_txt // proj_tile,),
            in_specs=[pl.BlockSpec((proj_tile, E), lambda t: (t, 0)),
                      pl.BlockSpec((H * (E + L), E), lambda t: (0, 0))],
            out_specs=[pl.BlockSpec((proj_tile, H * E), lambda t: (t, 0)),
                       pl.BlockSpec((proj_tile, H * L), lambda t: (t, 0))],
        ),
        compiler_params=pltpu.CompilerParams(
            dimension_semantics=("parallel",),
            vmem_limit_bytes=vmem),
    )(text, wkv_all)

    # --- kernel 2: attention + output linear + residual ----------------------
    if q_tile is None:
        q_tile = _pick_tile(n_lat, 256)
    if kv_tile is None:
        kv_tile = _pick_tile(n_txt, 512)
    assert n_lat % q_tile == 0, "latent rows must divide the query tile"
    assert n_txt % kv_tile == 0, "text rows must divide the kv tile"

    grid = (n_lat // q_tile, n_txt // kv_tile)

    return pl.pallas_call(
        _cross_attn_kernel,
        out_shape=jax.ShapeDtypeStruct((n_lat, L), dtype),
        grid_spec=pltpu.PrefetchScalarGridSpec(
            num_scalar_prefetch=0,
            grid=grid,
            in_specs=[
                pl.BlockSpec((q_tile, L), lambda i, j: (i, 0)),       # latent tile
                pl.BlockSpec((H * E, L), lambda i, j: (0, 0)),        # fused Wq
                pl.BlockSpec((kv_tile, H * E), lambda i, j: (j, 0)),  # K (all heads)
                pl.BlockSpec((kv_tile, H * L), lambda i, j: (j, 0)),  # V (all heads)
                pl.BlockSpec((L, H * L), lambda i, j: (0, 0)),        # fused Wl
            ],
            out_specs=pl.BlockSpec((q_tile, L), lambda i, j: (i, 0)),
            scratch_shapes=[
                pltpu.VMEM((q_tile, H * E), dtype),        # Q, all heads
                pltpu.VMEM((H, q_tile, 1), jnp.float32),   # running max
                pltpu.VMEM((H, q_tile, 1), jnp.float32),   # running denom
                pltpu.VMEM((H, q_tile, L), jnp.float32),   # running P@V acc
            ],
        ),
        compiler_params=pltpu.CompilerParams(
            # latent-tile axis shards across TCs (v7x); text axis is a reduction.
            dimension_semantics=("parallel", "arbitrary"),
            vmem_limit_bytes=vmem),
    )(latent, wq_all, k_all, v_all, wl)


def _reference(latent, text, wq, wk, wv, wl):
    """Plain-JAX f32 reference mirroring the PyTorch forward."""
    H, E, _ = wq.shape
    lat = latent.astype(jnp.float32)
    txt = text.astype(jnp.float32)
    outs = []
    for h in range(H):
        q = lat @ wq[h].astype(jnp.float32).T
        k = txt @ wk[h].astype(jnp.float32).T
        v = txt @ wv[h].astype(jnp.float32).T
        s = (q @ k.T) / math.sqrt(E)
        a = jax.nn.softmax(s, axis=1)
        outs.append(a @ v)
    cat = jnp.concatenate(outs, axis=1)                    # (N_lat, H*L)
    return cat @ wl.astype(jnp.float32).T + lat


if __name__ == "__main__":
    # Small, lane-dense demo: latent_size L = 128 (== d_v), embedding_size
    # E = 128 (== d_k), H = 2 heads, 32 latent vectors, 256 text tokens.
    L, E, H = 128, 128, 2
    N_LAT, N_TXT = 32, 256

    key = jax.random.PRNGKey(0)
    k_lat, k_txt, k_q, k_k, k_v, k_o = jax.random.split(key, 6)

    dtype = jnp.bfloat16  # native MXU dtype; all accumulation is f32 in-kernel

    latent = jax.random.normal(k_lat, (N_LAT, L), jnp.float32).astype(dtype)
    text = jax.random.normal(k_txt, (N_TXT, E), jnp.float32).astype(dtype)

    # nn.Linear default init ~ U(-1/sqrt(fan_in), 1/sqrt(fan_in)).
    b_l = 1.0 / math.sqrt(L)       # Q: Linear(L -> E)
    b_e = 1.0 / math.sqrt(E)       # K: Linear(E -> E), V: Linear(E -> L)
    b_o = 1.0 / math.sqrt(L * H)   # output: Linear(L*H -> L)

    wq = jax.random.uniform(k_q, (H, E, L), jnp.float32, -b_l, b_l).astype(dtype)
    wk = jax.random.uniform(k_k, (H, E, E), jnp.float32, -b_e, b_e).astype(dtype)
    wv = jax.random.uniform(k_v, (H, L, E), jnp.float32, -b_e, b_e).astype(dtype)
    wl = jax.random.uniform(k_o, (L, H * L), jnp.float32, -b_o, b_o).astype(dtype)

    # q_tile=16 / kv_tile=128 exercise both grid axes (multi-tile online
    # softmax + megacore-parallel latent tiles) at the bf16-native (16,128) tile.
    out = cross_multi_headed_pallas(latent, text, wq, wk, wv, wl,
                                    q_tile=16, kv_tile=128)
    out = jax.block_until_ready(out)

    ref = _reference(latent, text, wq, wk, wv, wl)
    assert out.shape == (N_LAT, L)
    # bf16 MXU operands + bf16 output => looser tolerance than an all-f32 path.
    assert jnp.allclose(out.astype(jnp.float32), ref, atol=3e-2, rtol=3e-2), \
        "mismatch vs reference"

    print("KERNEL_OK")
</pallas_src>

<mosaic_0001>
module attributes {stable_mosaic.version = 11 : i64} {
  func.func @_kv_proj_kernel(%arg0: i32, %arg1: memref<256x128xbf16, #tpu.memory_space<vmem>>, %arg2: memref<512x128xbf16, #tpu.memory_space<vmem>>, %arg3: memref<256x256xbf16, #tpu.memory_space<vmem>>, %arg4: memref<256x256xbf16, #tpu.memory_space<vmem>>) attributes {dimension_semantics = [#tpu.dimension_semantics<parallel>], iteration_bounds = array<i64: 1>, scalar_prefetch = 0 : i64, scratch_operands = 0 : i64, tpu.core_type = #tpu.core_type<tc>, window_params = [{transform_indices = @transform_0, window_bounds = array<i64: 256, 128>}, {pipeline_mode = #tpu.pipeline_mode<synchronous>, transform_indices = @transform_1, window_bounds = array<i64: 512, 128>}, {transform_indices = @transform_2, window_bounds = array<i64: 256, 256>}, {transform_indices = @transform_3, window_bounds = array<i64: 256, 256>}]} {
    %c0 = arith.constant 0 : index
    %c0_0 = arith.constant 0 : index
    %0 = vector.load %arg1[%c0, %c0_0] : memref<256x128xbf16, #tpu.memory_space<vmem>>, vector<256x128xbf16>
    %c0_1 = arith.constant 0 : index
    %c0_2 = arith.constant 0 : index
    %1 = vector.load %arg2[%c0_1, %c0_2] : memref<512x128xbf16, #tpu.memory_space<vmem>>, vector<512x128xbf16>
    %cst = arith.constant dense<0.000000e+00> : vector<256x512xf32>
    %2 = tpu.matmul %0, %1, %cst {dimension_numbers = #tpu.dot_dimension_numbers<[1], [1], [0], [0], [0, 0, 1, 0], [], []>} : vector<256x128xbf16>, vector<512x128xbf16>, vector<256x512xf32> -> vector<256x512xf32>
    %3 = vector.extract_strided_slice %2 {offsets = [0, 0], sizes = [256, 256], strides = [1, 1]} : vector<256x512xf32> to vector<256x256xf32>
    %4 = arith.truncf %3 : vector<256x256xf32> to vector<256x256xbf16>
    %c0_3 = arith.constant 0 : index
    %c0_4 = arith.constant 0 : index
    %5 = vector.load %arg3[%c0_3, %c0_4] : memref<256x256xbf16, #tpu.memory_space<vmem>>, vector<256x256xbf16>
    tpu.vector_store %arg3[%c0_3, %c0_4], %4 {strides = array<i32>} : memref<256x256xbf16, #tpu.memory_space<vmem>>, vector<256x256xbf16>,
    %6 = vector.extract_strided_slice %2 {offsets = [0, 256], sizes = [256, 256], strides = [1, 1]} : vector<256x512xf32> to vector<256x256xf32>
    %7 = arith.truncf %6 : vector<256x256xf32> to vector<256x256xbf16>
    %c0_5 = arith.constant 0 : index
    %c0_6 = arith.constant 0 : index
    %8 = vector.load %arg4[%c0_5, %c0_6] : memref<256x256xbf16, #tpu.memory_space<vmem>>, vector<256x256xbf16>
    tpu.vector_store %arg4[%c0_5, %c0_6], %7 {strides = array<i32>} : memref<256x256xbf16, #tpu.memory_space<vmem>>, vector<256x256xbf16>,
    return
  }
  func.func @transform_0(%arg0: i32) -> (i32, i32) {
    %c0_i32 = arith.constant 0 : i32
    %c0_i32_0 = arith.constant 0 : i32
    return %arg0, %c0_i32 : i32, i32
  }
  func.func @transform_1(%arg0: i32) -> (i32, i32) {
    %c0_i32 = arith.constant 0 : i32
    %c0_i32_0 = arith.constant 0 : i32
    %c0_i32_1 = arith.constant 0 : i32
    return %c0_i32, %c0_i32_0 : i32, i32
  }
  func.func @transform_2(%arg0: i32) -> (i32, i32) {
    %c0_i32 = arith.constant 0 : i32
    %c0_i32_0 = arith.constant 0 : i32
    return %arg0, %c0_i32 : i32, i32
  }
  func.func @transform_3(%arg0: i32) -> (i32, i32) {
    %c0_i32 = arith.constant 0 : i32
    %c0_i32_0 = arith.constant 0 : i32
    return %arg0, %c0_i32 : i32, i32
  }
}

</mosaic_0001>

<llo_original>
// kernel: tpu_custom_call.1
$region0: #{tpu_custom_call.1}
  #allocation0 [shape = 'u32[]', space=smem, size = 0x4, offset = 0x4, fixed_abs, tag = 'smem constant byte address 0x4 - core index']
  #allocation1 [shape = 'u32[144,128]{1,0:T(1,128)}', space=vmem, size = 0x12000, scoped, tag = 'internal scratch']
  %s0 = inlined_call_operand.hbm [shape: bf16[256,128], index: 0, kind: input, shape index: {}]
  %s1 = inlined_call_operand.hbm [shape: bf16[512,128], index: 1, kind: input, shape index: {}]
  %s2 = inlined_call_operand.hbm [shape: bf16[256,256], index: 2, kind: output, shape index: {0}]
  %s3 = inlined_call_operand.hbm [shape: bf16[256,256], index: 3, kind: output, shape index: {1}]
  %4 = xla_tuple %s2, %s3
  %s5 = sld [smem:[#allocation0]]
  $region34: #{tpu_custom_call.1} parent=0
    _
  %s7 = ssub.s32 1, %s5
  %s8 = scalar_select 0, %s7, %s5
  $region1: #{tpu_custom_call.1} parent=0
    #allocation2 [shape = 'u8[65536]{0}', space=vmem, size = 0x10000, scoped, tag = 'input window, operand 0, single buffered']
    #allocation3 [shape = 's32[1]{0}', space=sflag, size = 0x4, scoped, tag = 'scoped memory for tpu_custom_call.1']
    #allocation4 [shape = 's32[1]{0}', space=sflag, size = 0x4, scoped, tag = 'scoped memory for tpu_custom_call.1']
    #allocation5 [shape = 'u8[131072]{0}', space=vmem, size = 0x20000, scoped, tag = 'input window, operand 1, single buffered']
    #allocation6 [shape = 's32[1]{0}', space=sflag, size = 0x4, scoped, tag = 'scoped memory for tpu_custom_call.1']
    #allocation7 [shape = 'u8[131072]{0}', space=vmem, size = 0x20000, scoped, tag = 'output window, operand 0, single buffered']
    #allocation8 [shape = 'u8[131072]{0}', space=vmem, size = 0x20000, scoped, tag = 'output window, operand 1, single buffered']
    #allocation9 [shape = 's32[1]{0}', space=sflag, size = 0x4, scoped, tag = 'scoped memory for tpu_custom_call.1']
    %9 = vsyncpa [#allocation3], 0
    %10 = vsyncpa [#allocation6], 0
    %11 = vsyncpa [#allocation4], 0
    %12 = vsyncpa [#allocation9], 0
    // Predicated region
    $region2: #{tpu_custom_call.1} parent=1 // pred_check
      _
    $region3: #{tpu_custom_call.1} parent=1 // pred_check_branch
      %14 = sbr.rel (0) target = $region5
    $region4: #{tpu_custom_call.1} parent=1 // pred_region
      %s16 = ssub.s32 2048, 2048
      %17 = vsyncadd [#allocation3], %s16
      %s18 = sshll.u32 [#allocation2], 4
      %s19 = int_to_ptr.vmem [resolvable:$true] %s18
      %24 = dma.hbm_to_vmem [thread:$0]  %s0, 2048, %s19, [#allocation3], 64, 64, 4
    $region5: #{tpu_custom_call.1} parent=1 // pred_fallthru
      _
    // Predicated region
    $region6: #{tpu_custom_call.1} parent=1 // pred_check
      _
    $region7: #{tpu_custom_call.1} parent=1 // pred_check_branch
      %26 = sbr.rel (0) target = $region9
    $region8: #{tpu_custom_call.1} parent=1 // pred_region
      %s28 = ssub.s32 4096, 4096
      %29 = vsyncadd [#allocation6], %s28
      %s30 = sshll.u32 [#allocation5], 4
      %s31 = int_to_ptr.vmem [resolvable:$true] %s30
      %36 = dma.hbm_to_vmem [thread:$0]  %s1, 4096, %s31, [#allocation6], 64, 64, 4
    $region9: #{tpu_custom_call.1} parent=1 // pred_fallthru
      _
    // Predicated region
    $region10: #{tpu_custom_call.1} parent=1 // pred_check
      _
    $region11: #{tpu_custom_call.1} parent=1 // pred_check_branch
      %38 = sbr.rel (0) target = $region13
    $region12: #{tpu_custom_call.1} parent=1 // pred_region
      %39 = dma.done [#allocation3], 2048
    $region13: #{tpu_custom_call.1} parent=1 // pred_fallthru
      _
    // Predicated region
    $region14: #{tpu_custom_call.1} parent=1 // pred_check
      _
    $region15: #{tpu_custom_call.1} parent=1 // pred_check_branch
      %41 = sbr.rel (0) target = $region17
    $region16: #{tpu_custom_call.1} parent=1 // pred_region
      %42 = dma.done [#allocation6], 4096
    $region17: #{tpu_custom_call.1} parent=1 // pred_fallthru
      _
    %v44 = vld [vmem:[#allocation2] sm:$0xf]
    %v45 = vld [vmem:[#allocation2 + $0x4] sm:$0xf]
    %v46 = vld [vmem:[#allocation2 + $0x8] sm:$0xf]
    %v47 = vld [vmem:[#allocation2 + $0xc] sm:$0xf]
    %v48 = vld [vmem:[#allocation2 + $0x10] sm:$0xf]
    %v49 = vld [vmem:[#allocation2 + $0x14] sm:$0xf]
    %v50 = vld [vmem:[#allocation2 + $0x18] sm:$0xf]
    %v51 = vld [vmem:[#allocation2 + $0x1c] sm:$0xf]
    %v52 = vld [vmem:[#allocation2 + $0x20] sm:$0xf]
    %v53 = vld [vmem:[#allocation2 + $0x24] sm:$0xf]
    %v54 = vld [vmem:[#allocation2 + $0x28] sm:$0xf]
    %v55 = vld [vmem:[#allocation2 + $0x2c] sm:$0xf]
    %v56 = vld [vmem:[#allocation2 + $0x30] sm:$0xf]
    %v57 = vld [vmem:[#allocation2 + $0x34] sm:$0xf]
    %v58 = vld [vmem:[#allocation2 + $0x38] sm:$0xf]
    %v59 = vld [vmem:[#allocation2 + $0x3c] sm:$0xf]
    %v60 = vld [vmem:[#allocation2 + $0x40] sm:$0xf]
    %v61 = vld [vmem:[#allocation2 + $0x44] sm:$0xf]
    %v62 = vld [vmem:[#allocation2 + $0x48] sm:$0xf]
    %v63 = vld [vmem:[#allocation2 + $0x4c] sm:$0xf]
    %v64 = vld [vmem:[#allocation2 + $0x50] sm:$0xf]
    %v65 = vld [vmem:[#allocation2 + $0x54] sm:$0xf]
    %v66 = vld [vmem:[#allocation2 + $0x58] sm:$0xf]
    %v67 = vld [vmem:[#allocation2 + $0x5c] sm:$0xf]
    %v68 = vld [vmem:[#allocation2 + $0x60] sm:$0xf]
    %v69 = vld [vmem:[#allocation2 + $0x64] sm:$0xf]
    %v70 = vld [vmem:[#allocation2 + $0x68] sm:$0xf]
    %v71 = vld [vmem:[#allocation2 + $0x6c] sm:$0xf]
    %v72 = vld [vmem:[#allocation2 + $0x70] sm:$0xf]
    %v73 = vld [vmem:[#allocation2 + $0x74] sm:$0xf]
    %v74 = vld [vmem:[#allocation2 + $0x78] sm:$0xf]
    %v75 = vld [vmem:[#allocation2 + $0x7c] sm:$0xf]
    %v76 = vld [vmem:[#allocation5] sm:$0xf]
    %v77 = vld [vmem:[#allocation5 + $0x4] sm:$0xf]
    %v78 = vld [vmem:[#allocation5 + $0x8] sm:$0xf]
    %v79 = vld [vmem:[#allocation5 + $0xc] sm:$0xf]
    %v80 = vld [vmem:[#allocation5 + $0x10] sm:$0xf]
    %v81 = vld [vmem:[#allocation5 + $0x14] sm:$0xf]
    %v82 = vld [vmem:[#allocation5 + $0x18] sm:$0xf]
    %v83 = vld [vmem:[#allocation5 + $0x1c] sm:$0xf]
    %v84 = vld [vmem:[#allocation5 + $0x20] sm:$0xf]
    %v85 = vld [vmem:[#allocation5 + $0x24] sm:$0xf]
    %v86 = vld [vmem:[#allocation5 + $0x28] sm:$0xf]
    %v87 = vld [vmem:[#allocation5 + $0x2c] sm:$0xf]
    %v88 = vld [vmem:[#allocation5 + $0x30] sm:$0xf]
    %v89 = vld [vmem:[#allocation5 + $0x34] sm:$0xf]
    %v90 = vld [vmem:[#allocation5 + $0x38] sm:$0xf]
    %v91 = vld [vmem:[#allocation5 + $0x3c] sm:$0xf]
    %v92 = vld [vmem:[#allocation5 + $0x40] sm:$0xf]
    %v93 = vld [vmem:[#allocation5 + $0x44] sm:$0xf]
    %v94 = vld [vmem:[#allocation5 + $0x48] sm:$0xf]
    %v95 = vld [vmem:[#allocation5 + $0x4c] sm:$0xf]
    %v96 = vld [vmem:[#allocation5 + $0x50] sm:$0xf]
    %v97 = vld [vmem:[#allocation5 + $0x54] sm:$0xf]
    %v98 = vld [vmem:[#allocation5 + $0x58] sm:$0xf]
    %v99 = vld [vmem:[#allocation5 + $0x5c] sm:$0xf]
    %v100 = vld [vmem:[#allocation5 + $0x60] sm:$0xf]
    %v101 = vld [vmem:[#allocation5 + $0x64] sm:$0xf]
    %v102 = vld [vmem:[#allocation5 + $0x68] sm:$0xf]
    %v103 = vld [vmem:[#allocation5 + $0x6c] sm:$0xf]
    %v104 = vld [vmem:[#allocation5 + $0x70] sm:$0xf]
    %v105 = vld [vmem:[#allocation5 + $0x74] sm:$0xf]
    %v106 = vld [vmem:[#allocation5 + $0x78] sm:$0xf]
    %v107 = vld [vmem:[#allocation5 + $0x7c] sm:$0xf]
    %v108 = vld [vmem:[#allocation5 + $0x80] sm:$0xf]
    %v109 = vld [vmem:[#allocation5 + $0x84] sm:$0xf]
    %v110 = vld [vmem:[#allocation5 + $0x88] sm:$0xf]
    %v111 = vld [vmem:[#allocation5 + $0x8c] sm:$0xf]
    %v112 = vld [vmem:[#allocation5 + $0x90] sm:$0xf]
    %v113 = vld [vmem:[#allocation5 + $0x94] sm:$0xf]
    %v114 = vld [vmem:[#allocation5 + $0x98] sm:$0xf]
    %v115 = vld [vmem:[#allocation5 + $0x9c] sm:$0xf]
    %v116 = vld [vmem:[#allocation5 + $0xa0] sm:$0xf]
    %v117 = vld [vmem:[#allocation5 + $0xa4] sm:$0xf]
    %v118 = vld [vmem:[#allocation5 + $0xa8] sm:$0xf]
    %v119 = vld [vmem:[#allocation5 + $0xac] sm:$0xf]
    %v120 = vld [vmem:[#allocation5 + $0xb0] sm:$0xf]
    %v121 = vld [vmem:[#allocation5 + $0xb4] sm:$0xf]
    %v122 = vld [vmem:[#allocation5 + $0xb8] sm:$0xf]
    %v123 = vld [vmem:[#allocation5 + $0xbc] sm:$0xf]
    %v124 = vld [vmem:[#allocation5 + $0xc0] sm:$0xf]
    %v125 = vld [vmem:[#allocation5 + $0xc4] sm:$0xf]
    %v126 = vld [vmem:[#allocation5 + $0xc8] sm:$0xf]
    %v127 = vld [vmem:[#allocation5 + $0xcc] sm:$0xf]
    %v128 = vld [vmem:[#allocation5 + $0xd0] sm:$0xf]
    %v129 = vld [vmem:[#allocation5 + $0xd4] sm:$0xf]
    %v130 = vld [vmem:[#allocation5 + $0xd8] sm:$0xf]
    %v131 = vld [vmem:[#allocation5 + $0xdc] sm:$0xf]
    %v132 = vld [vmem:[#allocation5 + $0xe0] sm:$0xf]
    %v133 = vld [vmem:[#allocation5 + $0xe4] sm:$0xf]
    %v134 = vld [vmem:[#allocation5 + $0xe8] sm:$0xf]
    %v135 = vld [vmem:[#allocation5 + $0xec] sm:$0xf]
    %v136 = vld [vmem:[#allocation5 + $0xf0] sm:$0xf]
    %v137 = vld [vmem:[#allocation5 + $0xf4] sm:$0xf]
    %v138 = vld [vmem:[#allocation5 + $0xf8] sm:$0xf]
    %v139 = vld [vmem:[#allocation5 + $0xfc] sm:$0xf]
    %v172 = vunpack.c.l.b16 %v44
    %v173 = vunpack.c.l.b16 %v45
    %v174 = vunpack.c.l.b16 %v46
    %v175 = vunpack.c.l.b16 %v47
    %v176 = vunpack.c.l.b16 %v48
    %v177 = vunpack.c.l.b16 %v49
    %v178 = vunpack.c.l.b16 %v50
    %v179 = vunpack.c.l.b16 %v51
    %v180 = vunpack.c.l.b16 %v52
    %v181 = vunpack.c.l.b16 %v53
    %v182 = vunpack.c.l.b16 %v54
    %v183 = vunpack.c.l.b16 %v55
    %v184 = vunpack.c.l.b16 %v56
    %v185 = vunpack.c.l.b16 %v57
    %v186 = vunpack.c.l.b16 %v58
    %v187 = vunpack.c.l.b16 %v59
    %v188 = vunpack.c.l.b16 %v60
    %v189 = vunpack.c.l.b16 %v61
    %v190 = vunpack.c.l.b16 %v62
    %v191 = vunpack.c.l.b16 %v63
    %v192 = vunpack.c.l.b16 %v64
    %v193 = vunpack.c.l.b16 %v65
    %v194 = vunpack.c.l.b16 %v66
    %v195 = vunpack.c.l.b16 %v67
    %v196 = vunpack.c.l.b16 %v68
    %v197 = vunpack.c.l.b16 %v69
    %v198 = vunpack.c.l.b16 %v70
    %v199 = vunpack.c.l.b16 %v71
    %v200 = vunpack.c.l.b16 %v72
    %v201 = vunpack.c.l.b16 %v73
    %v202 = vunpack.c.l.b16 %v74
    %v203 = vunpack.c.l.b16 %v75
    %v204 = vpack.c.b16 %v173, %v172
    %v205 = vpack.c.b16 %v175, %v174
    %v206 = vpack.c.b16 %v177, %v176
    %v207 = vpack.c.b16 %v179, %v178
    %v208 = vpack.c.b16 %v181, %v180
    %v209 = vpack.c.b16 %v183, %v182
    %v210 = vpack.c.b16 %v185, %v184
    %v211 = vpack.c.b16 %v187, %v186
    %v212 = vpack.c.b16 %v189, %v188
    %v213 = vpack.c.b16 %v191, %v190
    %v214 = vpack.c.b16 %v193, %v192
    %v215 = vpack.c.b16 %v195, %v194
    %v216 = vpack.c.b16 %v197, %v196
    %v217 = vpack.c.b16 %v199, %v198
    %v218 = vpack.c.b16 %v201, %v200
    %v219 = vpack.c.b16 %v203, %v202
    %v300 = vunpack.c.l.b16 %v76
    %v301 = vunpack.c.l.b16 %v77
    %v302 = vunpack.c.l.b16 %v78
    %v303 = vunpack.c.l.b16 %v79
    %v304 = vunpack.c.l.b16 %v80
    %v305 = vunpack.c.l.b16 %v81
    %v306 = vunpack.c.l.b16 %v82
    %v307 = vunpack.c.l.b16 %v83
    %v308 = vunpack.c.l.b16 %v84
    %v309 = vunpack.c.l.b16 %v85
    %v310 = vunpack.c.l.b16 %v86
    %v311 = vunpack.c.l.b16 %v87
    %v312 = vunpack.c.l.b16 %v88
    %v313 = vunpack.c.l.b16 %v89
    %v314 = vunpack.c.l.b16 %v90
    %v315 = vunpack.c.l.b16 %v91
    %v316 = vunpack.c.l.b16 %v92
    %v317 = vunpack.c.l.b16 %v93
    %v318 = vunpack.c.l.b16 %v94
    %v319 = vunpack.c.l.b16 %v95
    %v320 = vunpack.c.l.b16 %v96
    %v321 = vunpack.c.l.b16 %v97
    %v322 = vunpack.c.l.b16 %v98
    %v323 = vunpack.c.l.b16 %v99
    %v324 = vunpack.c.l.b16 %v100
    %v325 = vunpack.c.l.b16 %v101
    %v326 = vunpack.c.l.b16 %v102
    %v327 = vunpack.c.l.b16 %v103
    %v328 = vunpack.c.l.b16 %v104
    %v329 = vunpack.c.l.b16 %v105
    %v330 = vunpack.c.l.b16 %v106
    %v331 = vunpack.c.l.b16 %v107
    %v332 = vunpack.c.l.b16 %v108
    %v333 = vunpack.c.l.b16 %v109
    %v334 = vunpack.c.l.b16 %v110
    %v335 = vunpack.c.l.b16 %v111
    %v336 = vunpack.c.l.b16 %v112
    %v337 = vunpack.c.l.b16 %v113
    %v338 = vunpack.c.l.b16 %v114
    %v339 = vunpack.c.l.b16 %v115
    %v340 = vunpack.c.l.b16 %v116
    %v341 = vunpack.c.l.b16 %v117
    %v342 = vunpack.c.l.b16 %v118
    %v343 = vunpack.c.l.b16 %v119
    %v344 = vunpack.c.l.b16 %v120
    %v345 = vunpack.c.l.b16 %v121
    %v346 = vunpack.c.l.b16 %v122
    %v347 = vunpack.c.l.b16 %v123
    %v348 = vunpack.c.l.b16 %v124
    %v349 = vunpack.c.l.b16 %v125
    %v350 = vunpack.c.l.b16 %v126
    %v351 = vunpack.c.l.b16 %v127
    %v352 = vunpack.c.l.b16 %v128
    %v353 = vunpack.c.l.b16 %v129
    %v354 = vunpack.c.l.b16 %v130
    %v355 = vunpack.c.l.b16 %v131
    %v356 = vunpack.c.l.b16 %v132
    %v357 = vunpack.c.l.b16 %v133
    %v358 = vunpack.c.l.b16 %v134
    %v359 = vunpack.c.l.b16 %v135
    %v360 = vunpack.c.l.b16 %v136
    %v361 = vunpack.c.l.b16 %v137
    %v362 = vunpack.c.l.b16 %v138
    %v363 = vunpack.c.l.b16 %v139
    %v364 = vpack.c.b16 %v301, %v300
    %v365 = vpack.c.b16 %v303, %v302
    %v366 = vpack.c.b16 %v305, %v304
    %v367 = vpack.c.b16 %v307, %v306
    %v368 = vpack.c.b16 %v309, %v308
    %v369 = vpack.c.b16 %v311, %v310
    %v370 = vpack.c.b16 %v313, %v312
    %v371 = vpack.c.b16 %v315, %v314
    %v372 = vpack.c.b16 %v317, %v316
    %v373 = vpack.c.b16 %v319, %v318
    %v374 = vpack.c.b16 %v321, %v320
    %v375 = vpack.c.b16 %v323, %v322
    %v376 = vpack.c.b16 %v325, %v324
    %v377 = vpack.c.b16 %v327, %v326
    %v378 = vpack.c.b16 %v329, %v328
    %v379 = vpack.c.b16 %v331, %v330
    %v380 = vpack.c.b16 %v333, %v332
    %v381 = vpack.c.b16 %v335, %v334
    %v382 = vpack.c.b16 %v337, %v336
    %v383 = vpack.c.b16 %v339, %v338
    %v384 = vpack.c.b16 %v341, %v340
    %v385 = vpack.c.b16 %v343, %v342
    %v386 = vpack.c.b16 %v345, %v344
    %v387 = vpack.c.b16 %v347, %v346
    %v388 = vpack.c.b16 %v349, %v348
    %v389 = vpack.c.b16 %v351, %v350
    %v390 = vpack.c.b16 %v353, %v352
    %v391 = vpack.c.b16 %v355, %v354
    %v392 = vpack.c.b16 %v357, %v356
    %v393 = vpack.c.b16 %v359, %v358
    %v394 = vpack.c.b16 %v361, %v360
    %v395 = vpack.c.b16 %v363, %v362
    %428 = vmatprep.subr.bf16.mxu0 0
    %429 = vmatpush1.bf16.xpose.msra.mxu0 %v364
    %430 = vmatprep.subr.bf16.mxu0 0
    %431 = vmatpush1.bf16.xpose.msra.mxu0 %v365
    %432 = vmatprep.subr.bf16.mxu0 0
    %433 = vmatpush1.bf16.xpose.msra.mxu0 %v366
    %434 = vmatprep.subr.bf16.mxu0 0
    %435 = vmatpush1.bf16.xpose.msra.mxu0 %v367
    %436 = vmatprep.subr.bf16.mxu0 0
    %437 = vmatpush1.bf16.xpose.msra.mxu0 %v368
    %438 = vmatprep.subr.bf16.mxu0 0
    %439 = vmatpush1.bf16.xpose.msra.mxu0 %v369
    %440 = vmatprep.subr.bf16.mxu0 0
    %441 = vmatpush1.bf16.xpose.msra.mxu0 %v370
    %442 = vmatprep.subr.bf16.mxu0 0
    %443 = vmatpush1.bf16.xpose.msra.mxu0 %v371
    %444 = vmatprep.subr.bf16.mxu0 0
    %445 = vmatpush1.bf16.xpose.msra.mxu0 %v372
    %446 = vmatprep.subr.bf16.mxu0 0
    %447 = vmatpush1.bf16.xpose.msra.mxu0 %v373
    %448 = vmatprep.subr.bf16.mxu0 0
    %449 = vmatpush1.bf16.xpose.msra.mxu0 %v374
    %450 = vmatprep.subr.bf16.mxu0 0
    %451 = vmatpush1.bf16.xpose.msra.mxu0 %v375
    %452 = vmatprep.subr.bf16.mxu0 0
    %453 = vmatpush1.bf16.xpose.msra.mxu0 %v376
    %454 = vmatprep.subr.bf16.mxu0 0
    %455 = vmatpush1.bf16.xpose.msra.mxu0 %v377
    %456 = vmatprep.subr.bf16.mxu0 0
    %457 = vmatpush1.bf16.xpose.msra.mxu0 %v378
    %458 = vmatprep.subr.bf16.mxu0 0
    %459 = vmatpush1.bf16.xpose.msra.mxu0 %v379
    %460 = vmatprep.mubr.bf16.mxu0 0
    %461 = vmatmul.mubr.bf16.gmra.mrb[0].mxu0 %v204
    %v462 = vpop.f32.mrb[0].mxu0
    %v463 = vadd.f32 0.0, %v462
    %v464 = vpop.f32.mrb[0].mxu0
    %v465 = vadd.f32 0.0, %v464
    %v466 = vpop.f32.mrb[0].mxu0
    %v467 = vadd.f32 0.0, %v466
    %v468 = vpop.f32.mrb[0].mxu0
    %v469 = vadd.f32 0.0, %v468
    %470 = vmatprep.mubr.bf16.mxu0 0
    %471 = vmatmul.mubr.bf16.gmra.mrb[0].mxu0 %v205
    %v472 = vpop.f32.mrb[0].mxu0
    %v473 = vadd.f32 0.0, %v472
    %v474 = vpop.f32.mrb[0].mxu0
    %v475 = vadd.f32 0.0, %v474
    %v476 = vpop.f32.mrb[0].mxu0
    %v477 = vadd.f32 0.0, %v476
    %v478 = vpop.f32.mrb[0].mxu0
    %v479 = vadd.f32 0.0, %v478
    %480 = vmatprep.mubr.bf16.mxu0 0
    %481 = vmatmul.mubr.bf16.gmra.mrb[0].mxu0 %v206
    %v482 = vpop.f32.mrb[0].mxu0
    %v483 = vadd.f32 0.0, %v482
    %v484 = vpop.f32.mrb[0].mxu0
    %v485 = vadd.f32 0.0, %v484
    %v486 = vpop.f32.mrb[0].mxu0
    %v487 = vadd.f32 0.0, %v486
    %v488 = vpop.f32.mrb[0].mxu0
    %v489 = vadd.f32 0.0, %v488
    %490 = vmatprep.mubr.bf16.mxu0 0
    %491 = vmatmul.mubr.bf16.gmra.mrb[0].mxu0 %v207
    %v492 = vpop.f32.mrb[0].mxu0
    %v493 = vadd.f32 0.0, %v492
    %v494 = vpop.f32.mrb[0].mxu0
    %v495 = vadd.f32 0.0, %v494
    %v496 = vpop.f32.mrb[0].mxu0
    %v497 = vadd.f32 0.0, %v496
    %v498 = vpop.f32.mrb[0].mxu0
    %v499 = vadd.f32 0.0, %v498
    %500 = vmatprep.mubr.bf16.mxu0 0
    %501 = vmatmul.mubr.bf16.gmra.mrb[0].mxu0 %v208
    %v502 = vpop.f32.mrb[0].mxu0
    %v503 = vadd.f32 0.0, %v502
    %v504 = vpop.f32.mrb[0].mxu0
    %v505 = vadd.f32 0.0, %v504
    %v506 = vpop.f32.mrb[0].mxu0
    %v507 = vadd.f32 0.0, %v506
    %v508 = vpop.f32.mrb[0].mxu0
    %v509 = vadd.f32 0.0, %v508
    %510 = vmatprep.mubr.bf16.mxu0 0
    %511 = vmatmul.mubr.bf16.gmra.mrb[0].mxu0 %v209
    %v512 = vpop.f32.mrb[0].mxu0
    %v513 = vadd.f32 0.0, %v512
    %v514 = vpop.f32.mrb[0].mxu0
    %v515 = vadd.f32 0.0, %v514
    %v516 = vpop.f32.mrb[0].mxu0
    %v517 = vadd.f32 0.0, %v516
    %v518 = vpop.f32.mrb[0].mxu0
    %v519 = vadd.f32 0.0, %v518
    %520 = vmatprep.mubr.bf16.mxu0 0
    %521 = vmatmul.mubr.bf16.gmra.mrb[0].mxu0 %v210
    %v522 = vpop.f32.mrb[0].mxu0
    %v523 = vadd.f32 0.0, %v522
    %v524 = vpop.f32.mrb[0].mxu0
    %v525 = vadd.f32 0.0, %v524
    %v526 = vpop.f32.mrb[0].mxu0
    %v527 = vadd.f32 0.0, %v526
    %v528 = vpop.f32.mrb[0].mxu0
    %v529 = vadd.f32 0.0, %v528
    %530 = vmatprep.mubr.bf16.mxu0 0
    %531 = vmatmul.mubr.bf16.gmra.mrb[0].mxu0 %v211
    %v532 = vpop.f32.mrb[0].mxu0
    %v533 = vadd.f32 0.0, %v532
    %v534 = vpop.f32.mrb[0].mxu0
    %v535 = vadd.f32 0.0, %v534
    %v536 = vpop.f32.mrb[0].mxu0
    %v537 = vadd.f32 0.0, %v536
    %v538 = vpop.f32.mrb[0].mxu0
    %v539 = vadd.f32 0.0, %v538
    %540 = vmatprep.mubr.bf16.mxu0 0
    %541 = vmatmul.mubr.bf16.gmra.mrb[0].mxu0 %v212
    %v542 = vpop.f32.mrb[0].mxu0
    %v543 = vadd.f32 0.0, %v542
    %v544 = vpop.f32.mrb[0].mxu0
    %v545 = vadd.f32 0.0, %v544
    %v546 = vpop.f32.mrb[0].mxu0
    %v547 = vadd.f32 0.0, %v546
    %v548 = vpop.f32.mrb[0].mxu0
    %v549 = vadd.f32 0.0, %v548
    %550 = vmatprep.mubr.bf16.mxu0 0
    %551 = vmatmul.mubr.bf16.gmra.mrb[0].mxu0 %v213
    %v552 = vpop.f32.mrb[0].mxu0
    %v553 = vadd.f32 0.0, %v552
    %v554 = vpop.f32.mrb[0].mxu0
    %v555 = vadd.f32 0.0, %v554
    %v556 = vpop.f32.mrb[0].mxu0
    %v557 = vadd.f32 0.0, %v556
    %v558 = vpop.f32.mrb[0].mxu0
    %v559 = vadd.f32 0.0, %v558
    %560 = vmatprep.mubr.bf16.mxu0 0
    %561 = vmatmul.mubr.bf16.gmra.mrb[0].mxu0 %v214
    %v562 = vpop.f32.mrb[0].mxu0
    %v563 = vadd.f32 0.0, %v562
    %v564 = vpop.f32.mrb[0].mxu0
    %v565 = vadd.f32 0.0, %v564
    %v566 = vpop.f32.mrb[0].mxu0
    %v567 = vadd.f32 0.0, %v566
    %v568 = vpop.f32.mrb[0].mxu0
    %v569 = vadd.f32 0.0, %v568
    %570 = vmatprep.mubr.bf16.mxu0 0
    %571 = vmatmul.mubr.bf16.gmra.mrb[0].mxu0 %v215
    %v572 = vpop.f32.mrb[0].mxu0
    %v573 = vadd.f32 0.0, %v572
    %v574 = vpop.f32.mrb[0].mxu0
    %v575 = vadd.f32 0.0, %v574
    %v576 = vpop.f32.mrb[0].mxu0
    %v577 = vadd.f32 0.0, %v576
    %v578 = vpop.f32.mrb[0].mxu0
    %v579 = vadd.f32 0.0, %v578
    %580 = vmatprep.mubr.bf16.mxu0 0
    %581 = vmatmul.mubr.bf16.gmra.mrb[0].mxu0 %v216
    %v582 = vpop.f32.mrb[0].mxu0
    %v583 = vadd.f32 0.0, %v582
    %v584 = vpop.f32.mrb[0].mxu0
    %v585 = vadd.f32 0.0, %v584
    %v586 = vpop.f32.mrb[0].mxu0
    %v587 = vadd.f32 0.0, %v586
    %v588 = vpop.f32.mrb[0].mxu0
    %v589 = vadd.f32 0.0, %v588
    %590 = vmatprep.mubr.bf16.mxu0 0
    %591 = vmatmul.mubr.bf16.gmra.mrb[0].mxu0 %v217
    %v592 = vpop.f32.mrb[0].mxu0
    %v593 = vadd.f32 0.0, %v592
    %v594 = vpop.f32.mrb[0].mxu0
    %v595 = vadd.f32 0.0, %v594
    %v596 = vpop.f32.mrb[0].mxu0
    %v597 = vadd.f32 0.0, %v596
    %v598 = vpop.f32.mrb[0].mxu0
    %v599 = vadd.f32 0.0, %v598
    %600 = vmatprep.mubr.bf16.mxu0 0
    %601 = vmatmul.mubr.bf16.gmra.mrb[0].mxu0 %v218
    %v602 = vpop.f32.mrb[0].mxu0
    %v603 = vadd.f32 0.0, %v602
    %v604 = vpop.f32.mrb[0].mxu0
    %v605 = vadd.f32 0.0, %v604
    %v606 = vpop.f32.mrb[0].mxu0
    %v607 = vadd.f32 0.0, %v606
    %v608 = vpop.f32.mrb[0].mxu0
    %v609 = vadd.f32 0.0, %v608
    %610 = vmatprep.mubr.bf16.mxu0 0
    %611 = vmatmul.mubr.bf16.gmra.mrb[0].mxu0 %v219
    %v612 = vpop.f32.mrb[0].mxu0
    %v613 = vadd.f32 0.0, %v612
    %v614 = vpop.f32.mrb[0].mxu0
    %v615 = vadd.f32 0.0, %v614
    %v616 = vpop.f32.mrb[0].mxu0
    %v617 = vadd.f32 0.0, %v616
    %v618 = vpop.f32.mrb[0].mxu0
    %v619 = vadd.f32 0.0, %v618
    %620 = vdwg.mxu0
    %621 = vmatprep.subr.bf16.mxu0 0
    %622 = vmatpush1.bf16.xpose.msra.mxu0 %v380
    %623 = vmatprep.subr.bf16.mxu0 0
    %624 = vmatpush1.bf16.xpose.msra.mxu0 %v381
    %625 = vmatprep.subr.bf16.mxu0 0
    %626 = vmatpush1.bf16.xpose.msra.mxu0 %v382
    %627 = vmatprep.subr.bf16.mxu0 0
    %628 = vmatpush1.bf16.xpose.msra.mxu0 %v383
    %629 = vmatprep.subr.bf16.mxu0 0
    %630 = vmatpush1.bf16.xpose.msra.mxu0 %v384
    %631 = vmatprep.subr.bf16.mxu0 0
    %632 = vmatpush1.bf16.xpose.msra.mxu0 %v385
    %633 = vmatprep.subr.bf16.mxu0 0
    %634 = vmatpush1.bf16.xpose.msra.mxu0 %v386
    %635 = vmatprep.subr.bf16.mxu0 0
    %636 = vmatpush1.bf16.xpose.msra.mxu0 %v387
    %637 = vmatprep.subr.bf16.mxu0 0
    %638 = vmatpush1.bf16.xpose.msra.mxu0 %v388
    %639 = vmatprep.subr.bf16.mxu0 0
    %640 = vmatpush1.bf16.xpose.msra.mxu0 %v389
    %641 = vmatprep.subr.bf16.mxu0 0
    %642 = vmatpush1.bf16.xpose.msra.mxu0 %v390
    %643 = vmatprep.subr.bf16.mxu0 0
    %644 = vmatpush1.bf16.xpose.msra.mxu0 %v391
    %645 = vmatprep.subr.bf16.mxu0 0
    %646 = vmatpush1.bf16.xpose.msra.mxu0 %v392
    %647 = vmatprep.subr.bf16.mxu0 0
    %648 = vmatpush1.bf16.xpose.msra.mxu0 %v393
    %649 = vmatprep.subr.bf16.mxu0 0
    %650 = vmatpush1.bf16.xpose.msra.mxu0 %v394
    %651 = vmatprep.subr.bf16.mxu0 0
    %652 = vmatpush1.bf16.xpose.msra.mxu0 %v395
    %653 = vmatprep.mubr.bf16.mxu0 0
    %654 = vmatmul.mubr.bf16.gmra.mrb[0].mxu0 %v204
    %v655 = vpop.f32.mrb[0].mxu0
    %v656 = vadd.f32 0.0, %v655
    %v657 = vpop.f32.mrb[0].mxu0
    %v658 = vadd.f32 0.0, %v657
    %v659 = vpop.f32.mrb[0].mxu0
    %v660 = vadd.f32 0.0, %v659
    %v661 = vpop.f32.mrb[0].mxu0
    %v662 = vadd.f32 0.0, %v661
    %663 = vmatprep.mubr.bf16.mxu0 0
    %664 = vmatmul.mubr.bf16.gmra.mrb[0].mxu0 %v205
    %v665 = vpop.f32.mrb[0].mxu0
    %v666 = vadd.f32 0.0, %v665
    %v667 = vpop.f32.mrb[0].mxu0
    %v668 = vadd.f32 0.0, %v667
    %v669 = vpop.f32.mrb[0].mxu0
    %v670 = vadd.f32 0.0, %v669
    %v671 = vpop.f32.mrb[0].mxu0
    %v672 = vadd.f32 0.0, %v671
    %673 = vmatprep.mubr.bf16.mxu0 0
    %674 = vmatmul.mubr.bf16.gmra.mrb[0].mxu0 %v206
    %v675 = vpop.f32.mrb[0].mxu0
    %v676 = vadd.f32 0.0, %v675
    %v677 = vpop.f32.mrb[0].mxu0
    %v678 = vadd.f32 0.0, %v677
    %v679 = vpop.f32.mrb[0].mxu0
    %v680 = vadd.f32 0.0, %v679
    %v681 = vpop.f32.mrb[0].mxu0
    %v682 = vadd.f32 0.0, %v681
    %683 = vmatprep.mubr.bf16.mxu0 0
    %684 = vmatmul.mubr.bf16.gmra.mrb[0].mxu0 %v207
    %v685 = vpop.f32.mrb[0].mxu0
    %v686 = vadd.f32 0.0, %v685
    %v687 = vpop.f32.mrb[0].mxu0
    %v688 = vadd.f32 0.0, %v687
    %v689 = vpop.f32.mrb[0].mxu0
    %v690 = vadd.f32 0.0, %v689
    %v691 = vpop.f32.mrb[0].mxu0
    %v692 = vadd.f32 0.0, %v691
    %693 = vmatprep.mubr.bf16.mxu0 0
    %694 = vmatmul.mubr.bf16.gmra.mrb[0].mxu0 %v208
    %v695 = vpop.f32.mrb[0].mxu0
    %v696 = vadd.f32 0.0, %v695
    %v697 = vpop.f32.mrb[0].mxu0
    %v698 = vadd.f32 0.0, %v697
    %v699 = vpop.f32.mrb[0].mxu0
    %v700 = vadd.f32 0.0, %v699
    %v701 = vpop.f32.mrb[0].mxu0
    %v702 = vadd.f32 0.0, %v701
    %703 = vmatprep.mubr.bf16.mxu0 0
    %704 = vmatmul.mubr.bf16.gmra.mrb[0].mxu0 %v209
    %v705 = vpop.f32.mrb[0].mxu0
    %v706 = vadd.f32 0.0, %v705
    %v707 = vpop.f32.mrb[0].mxu0
    %v708 = vadd.f32 0.0, %v707
    %v709 = vpop.f32.mrb[0].mxu0
    %v710 = vadd.f32 0.0, %v709
    %v711 = vpop.f32.mrb[0].mxu0
    %v712 = vadd.f32 0.0, %v711
    %713 = vmatprep.mubr.bf16.mxu0 0
    %714 = vmatmul.mubr.bf16.gmra.mrb[0].mxu0 %v210
    %v715 = vpop.f32.mrb[0].mxu0
    %v716 = vadd.f32 0.0, %v715
    %v717 = vpop.f32.mrb[0].mxu0
    %v718 = vadd.f32 0.0, %v717
    %v719 = vpop.f32.mrb[0].mxu0
    %v720 = vadd.f32 0.0, %v719
    %v721 = vpop.f32.mrb[0].mxu0
    %v722 = vadd.f32 0.0, %v721
    %723 = vmatprep.mubr.bf16.mxu0 0
    %724 = vmatmul.mubr.bf16.gmra.mrb[0].mxu0 %v211
    %v725 = vpop.f32.mrb[0].mxu0
    %v726 = vadd.f32 0.0, %v725
    %v727 = vpop.f32.mrb[0].mxu0
    %v728 = vadd.f32 0.0, %v727
    %v729 = vpop.f32.mrb[0].mxu0
    %v730 = vadd.f32 0.0, %v729
    %v731 = vpop.f32.mrb[0].mxu0
    %v732 = vadd.f32 0.0, %v731
    %733 = vmatprep.mubr.bf16.mxu0 0
    %734 = vmatmul.mubr.bf16.gmra.mrb[0].mxu0 %v212
    %v735 = vpop.f32.mrb[0].mxu0
    %v736 = vadd.f32 0.0, %v735
    %v737 = vpop.f32.mrb[0].mxu0
    %v738 = vadd.f32 0.0, %v737
    %v739 = vpop.f32.mrb[0].mxu0
    %v740 = vadd.f32 0.0, %v739
    %v741 = vpop.f32.mrb[0].mxu0
    %v742 = vadd.f32 0.0, %v741
    %743 = vmatprep.mubr.bf16.mxu0 0
    %744 = vmatmul.mubr.bf16.gmra.mrb[0].mxu0 %v213
    %v745 = vpop.f32.mrb[0].mxu0
    %v746 = vadd.f32 0.0, %v745
    %v747 = vpop.f32.mrb[0].mxu0
    %v748 = vadd.f32 0.0, %v747
    %v749 = vpop.f32.mrb[0].mxu0
    %v750 = vadd.f32 0.0, %v749
    %v751 = vpop.f32.mrb[0].mxu0
    %v752 = vadd.f32 0.0, %v751
    %753 = vmatprep.mubr.bf16.mxu0 0
    %754 = vmatmul.mubr.bf16.gmra.mrb[0].mxu0 %v214
    %v755 = vpop.f32.mrb[0].mxu0
    %v756 = vadd.f32 0.0, %v755
    %v757 = vpop.f32.mrb[0].mxu0
    %v758 = vadd.f32 0.0, %v757
    %v759 = vpop.f32.mrb[0].mxu0
    %v760 = vadd.f32 0.0, %v759
    %v761 = vpop.f32.mrb[0].mxu0
    %v762 = vadd.f32 0.0, %v761
    %763 = vmatprep.mubr.bf16.mxu0 0
    %764 = vmatmul.mubr.bf16.gmra.mrb[0].mxu0 %v215
    %v765 = vpop.f32.mrb[0].mxu0
    %v766 = vadd.f32 0.0, %v765
    %v767 = vpop.f32.mrb[0].mxu0
    %v768 = vadd.f32 0.0, %v767
    %v769 = vpop.f32.mrb[0].mxu0
    %v770 = vadd.f32 0.0, %v769
    %v771 = vpop.f32.mrb[0].mxu0
    %v772 = vadd.f32 0.0, %v771
    %773 = vmatprep.mubr.bf16.mxu0 0
    %774 = vmatmul.mubr.bf16.gmra.mrb[0].mxu0 %v216
    %v775 = vpop.f32.mrb[0].mxu0
    %v776 = vadd.f32 0.0, %v775
    %v777 = vpop.f32.mrb[0].mxu0
    %v778 = vadd.f32 0.0, %v777
    %v779 = vpop.f32.mrb[0].mxu0
    %v780 = vadd.f32 0.0, %v779
    %v781 = vpop.f32.mrb[0].mxu0
    %v782 = vadd.f32 0.0, %v781
    %783 = vmatprep.mubr.bf16.mxu0 0
    %784 = vmatmul.mubr.bf16.gmra.mrb[0].mxu0 %v217
    %v785 = vpop.f32.mrb[0].mxu0
    %v786 = vadd.f32 0.0, %v785
    %v787 = vpop.f32.mrb[0].mxu0
    %v788 = vadd.f32 0.0, %v787
    %v789 = vpop.f32.mrb[0].mxu0
    %v790 = vadd.f32 0.0, %v789
    %v791 = vpop.f32.mrb[0].mxu0
    %v792 = vadd.f32 0.0, %v791
    %793 = vmatprep.mubr.bf16.mxu0 0
    %794 = vmatmul.mubr.bf16.gmra.mrb[0].mxu0 %v218
    %v795 = vpop.f32.mrb[0].mxu0
    %v796 = vadd.f32 0.0, %v795
    %v797 = vpop.f32.mrb[0].mxu0
    %v798 = vadd.f32 0.0, %v797
    %v799 = vpop.f32.mrb[0].mxu0
    %v800 = vadd.f32 0.0, %v799
    %v801 = vpop.f32.mrb[0].mxu0
    %v802 = vadd.f32 0.0, %v801
    %803 = vmatprep.mubr.bf16.mxu0 0
    %804 = vmatmul.mubr.bf16.gmra.mrb[0].mxu0 %v219
    %v805 = vpop.f32.mrb[0].mxu0
    %v806 = vadd.f32 0.0, %v805
    %v807 = vpop.f32.mrb[0].mxu0
    %v808 = vadd.f32 0.0, %v807
    %v809 = vpop.f32.mrb[0].mxu0
    %v810 = vadd.f32 0.0, %v809
    %v811 = vpop.f32.mrb[0].mxu0
    %v812 = vadd.f32 0.0, %v811
    %813 = vdwg.mxu0
    %v814 = vpack.c.bf16 %v467, %v463
    %v815 = vpack.c.bf16 %v469, %v465
    %v816 = vpack.c.bf16 %v477, %v473
    %v817 = vpack.c.bf16 %v479, %v475
    %v818 = vpack.c.bf16 %v487, %v483
    %v819 = vpack.c.bf16 %v489, %v485
    %v820 = vpack.c.bf16 %v497, %v493
    %v821 = vpack.c.bf16 %v499, %v495
    %v822 = vpack.c.bf16 %v507, %v503
    %v823 = vpack.c.bf16 %v509, %v505
    %v824 = vpack.c.bf16 %v517, %v513
    %v825 = vpack.c.bf16 %v519, %v515
    %v826 = vpack.c.bf16 %v527, %v523
    %v827 = vpack.c.bf16 %v529, %v525
    %v828 = vpack.c.bf16 %v537, %v533
    %v829 = vpack.c.bf16 %v539, %v535
    %v830 = vpack.c.bf16 %v547, %v543
    %v831 = vpack.c.bf16 %v549, %v545
    %v832 = vpack.c.bf16 %v557, %v553
    %v833 = vpack.c.bf16 %v559, %v555
    %v834 = vpack.c.bf16 %v567, %v563
    %v835 = vpack.c.bf16 %v569, %v565
    %v836 = vpack.c.bf16 %v577, %v573
    %v837 = vpack.c.bf16 %v579, %v575
    %v838 = vpack.c.bf16 %v587, %v583
    %v839 = vpack.c.bf16 %v589, %v585
    %v840 = vpack.c.bf16 %v597, %v593
    %v841 = vpack.c.bf16 %v599, %v595
    %v842 = vpack.c.bf16 %v607, %v603
    %v843 = vpack.c.bf16 %v609, %v605
    %v844 = vpack.c.bf16 %v617, %v613
    %v845 = vpack.c.bf16 %v619, %v615
    %v878 = vunpack.c.l.b16 %v814
    %v879 = vunpack.c.l.b16 %v815
    %v880 = vunpack.c.h.b16 %v814
    %v881 = vunpack.c.h.b16 %v815
    %v882 = vunpack.c.l.b16 %v816
    %v883 = vunpack.c.l.b16 %v817
    %v884 = vunpack.c.h.b16 %v816
    %v885 = vunpack.c.h.b16 %v817
    %v886 = vunpack.c.l.b16 %v818
    %v887 = vunpack.c.l.b16 %v819
    %v888 = vunpack.c.h.b16 %v818
    %v889 = vunpack.c.h.b16 %v819
    %v890 = vunpack.c.l.b16 %v820
    %v891 = vunpack.c.l.b16 %v821
    %v892 = vunpack.c.h.b16 %v820
    %v893 = vunpack.c.h.b16 %v821
    %v894 = vunpack.c.l.b16 %v822
    %v895 = vunpack.c.l.b16 %v823
    %v896 = vunpack.c.h.b16 %v822
    %v897 = vunpack.c.h.b16 %v823
    %v898 = vunpack.c.l.b16 %v824
    %v899 = vunpack.c.l.b16 %v825
    %v900 = vunpack.c.h.b16 %v824
    %v901 = vunpack.c.h.b16 %v825
    %v902 = vunpack.c.l.b16 %v826
    %v903 = vunpack.c.l.b16 %v827
    %v904 = vunpack.c.h.b16 %v826
    %v905 = vunpack.c.h.b16 %v827
    %v906 = vunpack.c.l.b16 %v828
    %v907 = vunpack.c.l.b16 %v829
    %v908 = vunpack.c.h.b16 %v828
    %v909 = vunpack.c.h.b16 %v829
    %v910 = vunpack.c.l.b16 %v830
    %v911 = vunpack.c.l.b16 %v831
    %v912 = vunpack.c.h.b16 %v830
    %v913 = vunpack.c.h.b16 %v831
    %v914 = vunpack.c.l.b16 %v832
    %v915 = vunpack.c.l.b16 %v833
    %v916 = vunpack.c.h.b16 %v832
    %v917 = vunpack.c.h.b16 %v833
    %v918 = vunpack.c.l.b16 %v834
    %v919 = vunpack.c.l.b16 %v835
    %v920 = vunpack.c.h.b16 %v834
    %v921 = vunpack.c.h.b16 %v835
    %v922 = vunpack.c.l.b16 %v836
    %v923 = vunpack.c.l.b16 %v837
    %v924 = vunpack.c.h.b16 %v836
    %v925 = vunpack.c.h.b16 %v837
    %v926 = vunpack.c.l.b16 %v838
    %v927 = vunpack.c.l.b16 %v839
    %v928 = vunpack.c.h.b16 %v838
    %v929 = vunpack.c.h.b16 %v839
    %v930 = vunpack.c.l.b16 %v840
    %v931 = vunpack.c.l.b16 %v841
    %v932 = vunpack.c.h.b16 %v840
    %v933 = vunpack.c.h.b16 %v841
    %v934 = vunpack.c.l.b16 %v842
    %v935 = vunpack.c.l.b16 %v843
    %v936 = vunpack.c.h.b16 %v842
    %v937 = vunpack.c.h.b16 %v843
    %v938 = vunpack.c.l.b16 %v844
    %v939 = vunpack.c.l.b16 %v845
    %v940 = vunpack.c.h.b16 %v844
    %v941 = vunpack.c.h.b16 %v845
    %v942 = vpack.c.b16 %v879, %v878
    %v943 = vpack.c.b16 %v881, %v880
    %v944 = vpack.c.b16 %v883, %v882
    %v945 = vpack.c.b16 %v885, %v884
    %v946 = vpack.c.b16 %v887, %v886
    %v947 = vpack.c.b16 %v889, %v888
    %v948 = vpack.c.b16 %v891, %v890
    %v949 = vpack.c.b16 %v893, %v892
    %v950 = vpack.c.b16 %v895, %v894
    %v951 = vpack.c.b16 %v897, %v896
    %v952 = vpack.c.b16 %v899, %v898
    %v953 = vpack.c.b16 %v901, %v900
    %v954 = vpack.c.b16 %v903, %v902
    %v955 = vpack.c.b16 %v905, %v904
    %v956 = vpack.c.b16 %v907, %v906
    %v957 = vpack.c.b16 %v909, %v908
    %v958 = vpack.c.b16 %v911, %v910
    %v959 = vpack.c.b16 %v913, %v912
    %v960 = vpack.c.b16 %v915, %v914
    %v961 = vpack.c.b16 %v917, %v916
    %v962 = vpack.c.b16 %v919, %v918
    %v963 = vpack.c.b16 %v921, %v920
    %v964 = vpack.c.b16 %v923, %v922
    %v965 = vpack.c.b16 %v925, %v924
    %v966 = vpack.c.b16 %v927, %v926
    %v967 = vpack.c.b16 %v929, %v928
    %v968 = vpack.c.b16 %v931, %v930
    %v969 = vpack.c.b16 %v933, %v932
    %v970 = vpack.c.b16 %v935, %v934
    %v971 = vpack.c.b16 %v937, %v936
    %v972 = vpack.c.b16 %v939, %v938
    %v973 = vpack.c.b16 %v941, %v940
    %1006 = vst [vmem:[#allocation7] sm:$0xff] %v942
    %1007 = vst [vmem:[#allocation7 + $0x8] sm:$0xff] %v943
    %1008 = vst [vmem:[#allocation7 + $0x10] sm:$0xff] %v944
    %1009 = vst [vmem:[#allocation7 + $0x18] sm:$0xff] %v945
    %1010 = vst [vmem:[#allocation7 + $0x20] sm:$0xff] %v946
    %1011 = vst [vmem:[#allocation7 + $0x28] sm:$0xff] %v947
    %1012 = vst [vmem:[#allocation7 + $0x30] sm:$0xff] %v948
    %1013 = vst [vmem:[#allocation7 + $0x38] sm:$0xff] %v949
    %1014 = vst [vmem:[#allocation7 + $0x40] sm:$0xff] %v950
    %1015 = vst [vmem:[#allocation7 + $0x48] sm:$0xff] %v951
    %1016 = vst [vmem:[#allocation7 + $0x50] sm:$0xff] %v952
    %1017 = vst [vmem:[#allocation7 + $0x58] sm:$0xff] %v953
    %1018 = vst [vmem:[#allocation7 + $0x60] sm:$0xff] %v954
    %1019 = vst [vmem:[#allocation7 + $0x68] sm:$0xff] %v955
    %1020 = vst [vmem:[#allocation7 + $0x70] sm:$0xff] %v956
    %1021 = vst [vmem:[#allocation7 + $0x78] sm:$0xff] %v957
    %1022 = vst [vmem:[#allocation7 + $0x80] sm:$0xff] %v958
    %1023 = vst [vmem:[#allocation7 + $0x88] sm:$0xff] %v959
    %1024 = vst [vmem:[#allocation7 + $0x90] sm:$0xff] %v960
    %1025 = vst [vmem:[#allocation7 + $0x98] sm:$0xff] %v961
    %1026 = vst [vmem:[#allocation7 + $0xa0] sm:$0xff] %v962
    %1027 = vst [vmem:[#allocation7 + $0xa8] sm:$0xff] %v963
    %1028 = vst [vmem:[#allocation7 + $0xb0] sm:$0xff] %v964
    %1029 = vst [vmem:[#allocation7 + $0xb8] sm:$0xff] %v965
    %1030 = vst [vmem:[#allocation7 + $0xc0] sm:$0xff] %v966
    %1031 = vst [vmem:[#allocation7 + $0xc8] sm:$0xff] %v967
    %1032 = vst [vmem:[#allocation7 + $0xd0] sm:$0xff] %v968
    %1033 = vst [vmem:[#allocation7 + $0xd8] sm:$0xff] %v969
    %1034 = vst [vmem:[#allocation7 + $0xe0] sm:$0xff] %v970
    %1035 = vst [vmem:[#allocation7 + $0xe8] sm:$0xff] %v971
    %1036 = vst [vmem:[#allocation7 + $0xf0] sm:$0xff] %v972
    %1037 = vst [vmem:[#allocation7 + $0xf8] sm:$0xff] %v973
    %v1038 = vpack.c.bf16 %v660, %v656
    %v1039 = vpack.c.bf16 %v662, %v658
    %v1040 = vpack.c.bf16 %v670, %v666
    %v1041 = vpack.c.bf16 %v672, %v668
    %v1042 = vpack.c.bf16 %v680, %v676
    %v1043 = vpack.c.bf16 %v682, %v678
    %v1044 = vpack.c.bf16 %v690, %v686
    %v1045 = vpack.c.bf16 %v692, %v688
    %v1046 = vpack.c.bf16 %v700, %v696
    %v1047 = vpack.c.bf16 %v702, %v698
    %v1048 = vpack.c.bf16 %v710, %v706
    %v1049 = vpack.c.bf16 %v712, %v708
    %v1050 = vpack.c.bf16 %v720, %v716
    %v1051 = vpack.c.bf16 %v722, %v718
    %v1052 = vpack.c.bf16 %v730, %v726
    %v1053 = vpack.c.bf16 %v732, %v728
    %v1054 = vpack.c.bf16 %v740, %v736
    %v1055 = vpack.c.bf16 %v742, %v738
    %v1056 = vpack.c.bf16 %v750, %v746
    %v1057 = vpack.c.bf16 %v752, %v748
    %v1058 = vpack.c.bf16 %v760, %v756
    %v1059 = vpack.c.bf16 %v762, %v758
    %v1060 = vpack.c.bf16 %v770, %v766
    %v1061 = vpack.c.bf16 %v772, %v768
    %v1062 = vpack.c.bf16 %v780, %v776
    %v1063 = vpack.c.bf16 %v782, %v778
    %v1064 = vpack.c.bf16 %v790, %v786
    %v1065 = vpack.c.bf16 %v792, %v788
    %v1066 = vpack.c.bf16 %v800, %v796
    %v1067 = vpack.c.bf16 %v802, %v798
    %v1068 = vpack.c.bf16 %v810, %v806
    %v1069 = vpack.c.bf16 %v812, %v808
    %v1102 = vunpack.c.l.b16 %v1038
    %v1103 = vunpack.c.l.b16 %v1039
    %v1104 = vunpack.c.h.b16 %v1038
    %v1105 = vunpack.c.h.b16 %v1039
    %v1106 = vunpack.c.l.b16 %v1040
    %v1107 = vunpack.c.l.b16 %v1041
    %v1108 = vunpack.c.h.b16 %v1040
    %v1109 = vunpack.c.h.b16 %v1041
    %v1110 = vunpack.c.l.b16 %v1042
    %v1111 = vunpack.c.l.b16 %v1043
    %v1112 = vunpack.c.h.b16 %v1042
    %v1113 = vunpack.c.h.b16 %v1043
    %v1114 = vunpack.c.l.b16 %v1044
    %v1115 = vunpack.c.l.b16 %v1045
    %v1116 = vunpack.c.h.b16 %v1044
    %v1117 = vunpack.c.h.b16 %v1045
    %v1118 = vunpack.c.l.b16 %v1046
    %v1119 = vunpack.c.l.b16 %v1047
    %v1120 = vunpack.c.h.b16 %v1046
    %v1121 = vunpack.c.h.b16 %v1047
    %v1122 = vunpack.c.l.b16 %v1048
    %v1123 = vunpack.c.l.b16 %v1049
    %v1124 = vunpack.c.h.b16 %v1048
    %v1125 = vunpack.c.h.b16 %v1049
    %v1126 = vunpack.c.l.b16 %v1050
    %v1127 = vunpack.c.l.b16 %v1051
    %v1128 = vunpack.c.h.b16 %v1050
    %v1129 = vunpack.c.h.b16 %v1051
    %v1130 = vunpack.c.l.b16 %v1052
    %v1131 = vunpack.c.l.b16 %v1053
    %v1132 = vunpack.c.h.b16 %v1052
    %v1133 = vunpack.c.h.b16 %v1053
    %v1134 = vunpack.c.l.b16 %v1054
    %v1135 = vunpack.c.l.b16 %v1055
    %v1136 = vunpack.c.h.b16 %v1054
    %v1137 = vunpack.c.h.b16 %v1055
    %v1138 = vunpack.c.l.b16 %v1056
    %v1139 = vunpack.c.l.b16 %v1057
    %v1140 = vunpack.c.h.b16 %v1056
    %v1141 = vunpack.c.h.b16 %v1057
    %v1142 = vunpack.c.l.b16 %v1058
    %v1143 = vunpack.c.l.b16 %v1059
    %v1144 = vunpack.c.h.b16 %v1058
    %v1145 = vunpack.c.h.b16 %v1059
    %v1146 = vunpack.c.l.b16 %v1060
    %v1147 = vunpack.c.l.b16 %v1061
    %v1148 = vunpack.c.h.b16 %v1060
    %v1149 = vunpack.c.h.b16 %v1061
    %v1150 = vunpack.c.l.b16 %v1062
    %v1151 = vunpack.c.l.b16 %v1063
    %v1152 = vunpack.c.h.b16 %v1062
    %v1153 = vunpack.c.h.b16 %v1063
    %v1154 = vunpack.c.l.b16 %v1064
    %v1155 = vunpack.c.l.b16 %v1065
    %v1156 = vunpack.c.h.b16 %v1064
    %v1157 = vunpack.c.h.b16 %v1065
    %v1158 = vunpack.c.l.b16 %v1066
    %v1159 = vunpack.c.l.b16 %v1067
    %v1160 = vunpack.c.h.b16 %v1066
    %v1161 = vunpack.c.h.b16 %v1067
    %v1162 = vunpack.c.l.b16 %v1068
    %v1163 = vunpack.c.l.b16 %v1069
    %v1164 = vunpack.c.h.b16 %v1068
    %v1165 = vunpack.c.h.b16 %v1069
    %v1166 = vpack.c.b16 %v1103, %v1102
    %v1167 = vpack.c.b16 %v1105, %v1104
    %v1168 = vpack.c.b16 %v1107, %v1106
    %v1169 = vpack.c.b16 %v1109, %v1108
    %v1170 = vpack.c.b16 %v1111, %v1110
    %v1171 = vpack.c.b16 %v1113, %v1112
    %v1172 = vpack.c.b16 %v1115, %v1114
    %v1173 = vpack.c.b16 %v1117, %v1116
    %v1174 = vpack.c.b16 %v1119, %v1118
    %v1175 = vpack.c.b16 %v1121, %v1120
    %v1176 = vpack.c.b16 %v1123, %v1122
    %v1177 = vpack.c.b16 %v1125, %v1124
    %v1178 = vpack.c.b16 %v1127, %v1126
    %v1179 = vpack.c.b16 %v1129, %v1128
    %v1180 = vpack.c.b16 %v1131, %v1130
    %v1181 = vpack.c.b16 %v1133, %v1132
    %v1182 = vpack.c.b16 %v1135, %v1134
    %v1183 = vpack.c.b16 %v1137, %v1136
    %v1184 = vpack.c.b16 %v1139, %v1138
    %v1185 = vpack.c.b16 %v1141, %v1140
    %v1186 = vpack.c.b16 %v1143, %v1142
    %v1187 = vpack.c.b16 %v1145, %v1144
    %v1188 = vpack.c.b16 %v1147, %v1146
    %v1189 = vpack.c.b16 %v1149, %v1148
    %v1190 = vpack.c.b16 %v1151, %v1150
    %v1191 = vpack.c.b16 %v1153, %v1152
    %v1192 = vpack.c.b16 %v1155, %v1154
    %v1193 = vpack.c.b16 %v1157, %v1156
    %v1194 = vpack.c.b16 %v1159, %v1158
    %v1195 = vpack.c.b16 %v1161, %v1160
    %v1196 = vpack.c.b16 %v1163, %v1162
    %v1197 = vpack.c.b16 %v1165, %v1164
    %1230 = vst [vmem:[#allocation8] sm:$0xff] %v1166
    %1231 = vst [vmem:[#allocation8 + $0x8] sm:$0xff] %v1167
    %1232 = vst [vmem:[#allocation8 + $0x10] sm:$0xff] %v1168
    %1233 = vst [vmem:[#allocation8 + $0x18] sm:$0xff] %v1169
    %1234 = vst [vmem:[#allocation8 + $0x20] sm:$0xff] %v1170
    %1235 = vst [vmem:[#allocation8 + $0x28] sm:$0xff] %v1171
    %1236 = vst [vmem:[#allocation8 + $0x30] sm:$0xff] %v1172
    %1237 = vst [vmem:[#allocation8 + $0x38] sm:$0xff] %v1173
    %1238 = vst [vmem:[#allocation8 + $0x40] sm:$0xff] %v1174
    %1239 = vst [vmem:[#allocation8 + $0x48] sm:$0xff] %v1175
    %1240 = vst [vmem:[#allocation8 + $0x50] sm:$0xff] %v1176
    %1241 = vst [vmem:[#allocation8 + $0x58] sm:$0xff] %v1177
    %1242 = vst [vmem:[#allocation8 + $0x60] sm:$0xff] %v1178
    %1243 = vst [vmem:[#allocation8 + $0x68] sm:$0xff] %v1179
    %1244 = vst [vmem:[#allocation8 + $0x70] sm:$0xff] %v1180
    %1245 = vst [vmem:[#allocation8 + $0x78] sm:$0xff] %v1181
    %1246 = vst [vmem:[#allocation8 + $0x80] sm:$0xff] %v1182
    %1247 = vst [vmem:[#allocation8 + $0x88] sm:$0xff] %v1183
    %1248 = vst [vmem:[#allocation8 + $0x90] sm:$0xff] %v1184
    %1249 = vst [vmem:[#allocation8 + $0x98] sm:$0xff] %v1185
    %1250 = vst [vmem:[#allocation8 + $0xa0] sm:$0xff] %v1186
    %1251 = vst [vmem:[#allocation8 + $0xa8] sm:$0xff] %v1187
    %1252 = vst [vmem:[#allocation8 + $0xb0] sm:$0xff] %v1188
    %1253 = vst [vmem:[#allocation8 + $0xb8] sm:$0xff] %v1189
    %1254 = vst [vmem:[#allocation8 + $0xc0] sm:$0xff] %v1190
    %1255 = vst [vmem:[#allocation8 + $0xc8] sm:$0xff] %v1191
    %1256 = vst [vmem:[#allocation8 + $0xd0] sm:$0xff] %v1192
    %1257 = vst [vmem:[#allocation8 + $0xd8] sm:$0xff] %v1193
    %1258 = vst [vmem:[#allocation8 + $0xe0] sm:$0xff] %v1194
    %1259 = vst [vmem:[#allocation8 + $0xe8] sm:$0xff] %v1195
    %1260 = vst [vmem:[#allocation8 + $0xf0] sm:$0xff] %v1196
    %1261 = vst [vmem:[#allocation8 + $0xf8] sm:$0xff] %v1197
    // Predicated region
    $region18: #{tpu_custom_call.1} parent=1 // pred_check
      _
    $region19: #{tpu_custom_call.1} parent=1 // pred_check_branch
      %1263 = sbr.rel (0) target = $region21
    $region20: #{tpu_custom_call.1} parent=1 // pred_region
      %s1265 = ssub.s32 4096, 4096
      %1266 = vsyncadd [#allocation4], %s1265
      %s1267 = sshll.u32 [#allocation7], 4
      %s1268 = int_to_ptr.vmem [resolvable:$true] %s1267
      %1273 = dma.vmem_to_hbm [thread:$0]  %s1268, 4096, %s2, [#allocation4], 128, 128, 8
    $region21: #{tpu_custom_call.1} parent=1 // pred_fallthru
      _
    // Predicated region
    $region22: #{tpu_custom_call.1} parent=1 // pred_check
      _
    $region23: #{tpu_custom_call.1} parent=1 // pred_check_branch
      %1275 = sbr.rel (0) target = $region25
    $region24: #{tpu_custom_call.1} parent=1 // pred_region
      %s1277 = ssub.s32 4096, 4096
      %1278 = vsyncadd [#allocation9], %s1277
      %s1279 = sshll.u32 [#allocation8], 4
      %s1280 = int_to_ptr.vmem [resolvable:$true] %s1279
      %1285 = dma.vmem_to_hbm [thread:$0]  %s1280, 4096, %s3, [#allocation9], 128, 128, 8
    $region25: #{tpu_custom_call.1} parent=1 // pred_fallthru
      _
    // Predicated region
    $region26: #{tpu_custom_call.1} parent=1 // pred_check
      _
    $region27: #{tpu_custom_call.1} parent=1 // pred_check_branch
      %1287 = sbr.rel (0) target = $region29
    $region28: #{tpu_custom_call.1} parent=1 // pred_region
      %1288 = dma.done [#allocation4], 4096
    $region29: #{tpu_custom_call.1} parent=1 // pred_fallthru
      _
    // Predicated region
    $region30: #{tpu_custom_call.1} parent=1 // pred_check
      _
    $region31: #{tpu_custom_call.1} parent=1 // pred_check_branch
      %1290 = sbr.rel (0) target = $region33
    $region32: #{tpu_custom_call.1} parent=1 // pred_region
      %1291 = dma.done [#allocation9], 4096
    $region33: #{tpu_custom_call.1} parent=1 // pred_fallthru
      _
    %1292 = vsyncpa [#allocation3], 1
    %1293 = vsyncpa [#allocation6], 1
    %1294 = vsyncpa [#allocation4], 1
    %1295 = vsyncpa [#allocation9], 1

</llo_original>
